<compile_context>
chip_gen: v7x
topology: tpu7x:2x2x1
jax: 0.10.0
libtpu: 0.0.40
codegen_flags: <defaults>
</compile_context>

<pallas_src>
import functools

import jax
import jax.numpy as jnp
from jax.experimental import pallas as pl
from jax.experimental.pallas import tpu as pltpu


_VMEM_LIMIT_BYTES = 32 * 1024 * 1024      # safe on v5e / v6e / v7x
_DEFAULT_BLOCK_BUDGET = 16 * 1024 * 1024  # double-buffered in+out block budget


# --------------------------------------------------------------------------
# Kernels
# --------------------------------------------------------------------------
def _cpca_fused_kernel(x_ref, w1t_ref, b1_ref, w2t_ref, b2_ref, o_ref):
    """Single-pass path. x_ref/o_ref: (Bt, C, HW) in the input dtype."""
    x = x_ref[...]                                           # (Bt, C, HW)
    bt = x.shape[0]
    inv_hw = 1.0 / x.shape[-1]

    # Spatial stats in f32, lane-major (C on lanes).
    s_sum = jnp.sum(x, axis=-1, dtype=jnp.float32)           # (Bt, C)
    s_max = jnp.max(x, axis=-1).astype(jnp.float32)          # (Bt, C)
    stats = jnp.concatenate([s_sum * inv_hw, s_max], axis=0)  # (2*Bt, C)

    # Both branches share one matmul per FC layer.
    h = jnp.dot(stats, w1t_ref[...],
                preferred_element_type=jnp.float32) + b1_ref[...]
    h = jnp.maximum(h, 0.0)                                  # (2*Bt, I)
    y = jnp.dot(h, w2t_ref[...],
                preferred_element_type=jnp.float32) + b2_ref[...]
    y = jax.nn.sigmoid(y)                                    # (2*Bt, C)
    att = y[:bt] + y[bt:]                                    # (Bt, C)

    # Broadcast-multiply over spatial; math in f32, store in the input dtype.
    o_ref[...] = (x.astype(jnp.float32) * att[:, :, None]).astype(o_ref.dtype)


def _cpca_stats_kernel(x_ref, w1t_ref, b1_ref, w2t_ref, b2_ref, att_ref,
                       sum_sc, max_sc, *, inv_hw):
    """Two-pass path, pass 1: HW-tiled stats -> (1, C, 1) f32 attention."""
    h_idx = pl.program_id(1)
    x = x_ref[0]                                             # (C, hw_tile)
    part_sum = jnp.sum(x, axis=-1, dtype=jnp.float32)[None, :]    # (1, C)
    part_max = jnp.max(x, axis=-1).astype(jnp.float32)[None, :]   # (1, C)

    @pl.when(h_idx == 0)
    def _():
        sum_sc[...] = part_sum
        max_sc[...] = part_max

    @pl.when(h_idx > 0)
    def _():
        sum_sc[...] = sum_sc[...] + part_sum
        max_sc[...] = jnp.maximum(max_sc[...], part_max)

    @pl.when(h_idx == pl.num_programs(1) - 1)
    def _():
        stats = jnp.concatenate([sum_sc[...] * inv_hw, max_sc[...]], axis=0)
        h = jnp.dot(stats, w1t_ref[...],
                    preferred_element_type=jnp.float32) + b1_ref[...]
        h = jnp.maximum(h, 0.0)                              # (2, I)
        y = jnp.dot(h, w2t_ref[...],
                    preferred_element_type=jnp.float32) + b2_ref[...]
        y = jax.nn.sigmoid(y)                                # (2, C)
        att = y[0:1] + y[1:2]                                # (1, C)
        att_ref[...] = att[:, :, None]                       # (1, C, 1)


def _cpca_apply_kernel(att_ref, x_ref, o_ref):
    """Two-pass path, pass 2: lane-tiled broadcast multiply."""
    att = att_ref[0]                                         # (C, 1) f32
    x = x_ref[0]                                             # (C, hw_tile)
    o_ref[0] = (x.astype(jnp.float32) * att).astype(o_ref.dtype)


# --------------------------------------------------------------------------
# Block-size heuristics
# --------------------------------------------------------------------------
def _largest_divisor_leq(n, cap):
    cap = max(1, min(n, cap))
    for d in range(cap, 0, -1):
        if n % d == 0:
            return d
    return 1


def _choose_bt(b, per_batch_bytes, budget):
    # 2x(in) + 2x(out) buffers of the block must fit the budget.
    bt_max = max(1, budget // max(1, 4 * per_batch_bytes))
    # Keep >=2 grid steps for v7x megacore unless the whole problem is tiny.
    if b >= 2 and b * per_batch_bytes > (2 << 20):
        bt_max = min(bt_max, max(1, b // 2))
    return _largest_divisor_leq(b, bt_max)


def _choose_hw_tile(hw, c, itemsize, budget):
    cap = max(128, budget // max(1, 4 * c * itemsize))
    divs = set()
    d = 1
    while d * d <= hw:
        if hw % d == 0:
            divs.add(d)
            divs.add(hw // d)
        d += 1
    cands = sorted(t for t in divs if t <= cap)
    lane_aligned = [t for t in cands if t % 128 == 0]
    if lane_aligned:
        return lane_aligned[-1]
    return cands[-1] if cands else hw


# --------------------------------------------------------------------------
# Wrapper
# --------------------------------------------------------------------------
def cpca_channel_attention(inputs, w1, b1, w2, b2, *,
                           block_budget_bytes=_DEFAULT_BLOCK_BUDGET):
    """inputs: (B, C, H, W). w1: (I, C) [fc1], b1: (I,), w2: (C, I) [fc2], b2: (C,).

    Returns (B, C, H, W) in the same dtype as `inputs`.
    """
    B, C, H, W = inputs.shape
    I = w1.shape[0]
    HW = H * W
    x = inputs.reshape(B, C, HW)
    itemsize = jnp.dtype(x.dtype).itemsize

    # FC params in f32, pre-transposed for lane-major intermediates.
    w1t = jnp.asarray(w1, jnp.float32).T.reshape(C, I)
    w2t = jnp.asarray(w2, jnp.float32).T.reshape(I, C)
    b1r = jnp.asarray(b1, jnp.float32).reshape(1, I)
    b2r = jnp.asarray(b2, jnp.float32).reshape(1, C)

    def weight_specs(index_map):
        return [
            pl.BlockSpec((C, I), index_map),
            pl.BlockSpec((1, I), index_map),
            pl.BlockSpec((I, C), index_map),
            pl.BlockSpec((1, C), index_map),
        ]

    per_batch_bytes = C * HW * itemsize

    if 4 * per_batch_bytes <= block_budget_bytes:
        # ---------- single-pass, batch-packed path ----------
        bt = _choose_bt(B, per_batch_bytes, block_budget_bytes)
        grid = (B // bt,)
        out = pl.pallas_call(
            _cpca_fused_kernel,
            out_shape=jax.ShapeDtypeStruct((B, C, HW), x.dtype),
            grid_spec=pltpu.PrefetchScalarGridSpec(
                num_scalar_prefetch=0,
                grid=grid,
                in_specs=[pl.BlockSpec((bt, C, HW), lambda i: (i, 0, 0))]
                         + weight_specs(lambda i: (0, 0)),
                out_specs=pl.BlockSpec((bt, C, HW), lambda i: (i, 0, 0)),
            ),
            compiler_params=pltpu.CompilerParams(
                dimension_semantics=("parallel",),
                vmem_limit_bytes=_VMEM_LIMIT_BYTES),
            cost_estimate=pl.CostEstimate(
                flops=3 * B * C * HW + 8 * B * C * I,
                transcendentals=2 * B * C,
                bytes_accessed=2 * B * C * HW * itemsize),
        )(x, w1t, b1r, w2t, b2r)
        return out.reshape(B, C, H, W)

    # ---------- two-pass, spatially-tiled path (large C*HW) ----------
    hw_tile = _choose_hw_tile(HW, C, itemsize, block_budget_bytes)
    n_hw = HW // hw_tile

    att = pl.pallas_call(
        functools.partial(_cpca_stats_kernel, inv_hw=1.0 / HW),
        out_shape=jax.ShapeDtypeStruct((B, C, 1), jnp.float32),
        grid_spec=pltpu.PrefetchScalarGridSpec(
            num_scalar_prefetch=0,
            grid=(B, n_hw),
            in_specs=[pl.BlockSpec((1, C, hw_tile), lambda b, h: (b, 0, h))]
                     + weight_specs(lambda b, h: (0, 0)),
            out_specs=pl.BlockSpec((1, C, 1), lambda b, h: (b, 0, 0)),
            scratch_shapes=[pltpu.VMEM((1, C), jnp.float32),
                            pltpu.VMEM((1, C), jnp.float32)],
        ),
        compiler_params=pltpu.CompilerParams(
            dimension_semantics=("parallel", "arbitrary"),
            vmem_limit_bytes=_VMEM_LIMIT_BYTES),
        cost_estimate=pl.CostEstimate(
            flops=2 * B * C * HW + 8 * B * C * I,
            transcendentals=2 * B * C,
            bytes_accessed=B * C * HW * itemsize),
    )(x, w1t, b1r, w2t, b2r)

    out = pl.pallas_call(
        _cpca_apply_kernel,
        out_shape=jax.ShapeDtypeStruct((B, C, HW), x.dtype),
        grid_spec=pltpu.PrefetchScalarGridSpec(
            num_scalar_prefetch=0,
            grid=(B, n_hw),
            in_specs=[pl.BlockSpec((1, C, 1), lambda b, h: (b, 0, 0)),
                      pl.BlockSpec((1, C, hw_tile), lambda b, h: (b, 0, h))],
            out_specs=pl.BlockSpec((1, C, hw_tile), lambda b, h: (b, 0, h)),
        ),
        compiler_params=pltpu.CompilerParams(
            dimension_semantics=("parallel", "parallel"),
            vmem_limit_bytes=_VMEM_LIMIT_BYTES),
        cost_estimate=pl.CostEstimate(
            flops=B * C * HW,
            transcendentals=0,
            bytes_accessed=2 * B * C * HW * itemsize),
    )(att, x)
    return out.reshape(B, C, H, W)


# --------------------------------------------------------------------------
# Pure-JAX reference (mirrors the PyTorch forward)
# --------------------------------------------------------------------------
def _reference(inputs, w1, b1, w2, b2):
    B, C, H, W = inputs.shape
    x = inputs.reshape(B, C, H * W).astype(jnp.float32)
    avg = jnp.mean(x, axis=-1)                               # (B, C)
    mx = jnp.max(x, axis=-1)                                 # (B, C)
    w1f, w2f = w1.astype(jnp.float32), w2.astype(jnp.float32)
    b1f, b2f = b1.astype(jnp.float32), b2.astype(jnp.float32)

    def branch(v):
        h = jax.nn.relu(v @ w1f.T + b1f)                     # (B, I)
        return jax.nn.sigmoid(h @ w2f.T + b2f)               # (B, C)

    att = branch(avg) + branch(mx)                           # (B, C)
    return (x * att[:, :, None]).reshape(B, C, H, W)


if __name__ == "__main__":
    key = jax.random.PRNGKey(0)
    B, C, H, W = 2, 4, 16, 16
    internal = 2  # internal_neurons

    k_x, k_w1, k_b1, k_w2, k_b2, k_x2 = jax.random.split(key, 6)
    inputs = jax.random.normal(k_x, (B, C, H, W), dtype=jnp.float32)
    # fc1: Conv2d(C -> internal, 1x1) == Linear(C -> internal)
    w1 = jax.random.normal(k_w1, (internal, C), dtype=jnp.float32) * 0.1
    b1 = jax.random.normal(k_b1, (internal,), dtype=jnp.float32) * 0.1
    # fc2: Conv2d(internal -> C, 1x1) == Linear(internal -> C)
    w2 = jax.random.normal(k_w2, (C, internal), dtype=jnp.float32) * 0.1
    b2 = jax.random.normal(k_b2, (C,), dtype=jnp.float32) * 0.1

    # 1) single-pass, batch-packed path (f32)
    out = jax.block_until_ready(cpca_channel_attention(inputs, w1, b1, w2, b2))
    ref = _reference(inputs, w1, b1, w2, b2)
    assert out.shape == (B, C, H, W) and out.dtype == inputs.dtype
    assert jnp.allclose(out, ref, atol=1e-5, rtol=1e-5), "f32 mismatch vs reference"

    # 2) single-pass path, bf16 input preserved end-to-end (only stats/FC in f32)
    inputs_bf16 = inputs.astype(jnp.bfloat16)
    out_bf16 = jax.block_until_ready(
        cpca_channel_attention(inputs_bf16, w1, b1, w2, b2))
    ref_bf16 = _reference(inputs_bf16, w1, b1, w2, b2)
    assert out_bf16.dtype == jnp.bfloat16
    assert jnp.allclose(out_bf16.astype(jnp.float32), ref_bf16,
                        atol=3e-2, rtol=3e-2), "bf16 mismatch vs reference"

    # 3) two-pass spatially-tiled path, forced via a tiny block budget
    B2, C2, H2, W2 = 2, 8, 32, 32
    inputs2 = jax.random.normal(k_x2, (B2, C2, H2, W2), dtype=jnp.float32)
    kk = jax.random.split(k_x2, 4)
    w1b = jax.random.normal(kk[0], (internal, C2), dtype=jnp.float32) * 0.1
    b1b = jax.random.normal(kk[1], (internal,), dtype=jnp.float32) * 0.1
    w2b = jax.random.normal(kk[2], (C2, internal), dtype=jnp.float32) * 0.1
    b2b = jax.random.normal(kk[3], (C2,), dtype=jnp.float32) * 0.1
    out2 = jax.block_until_ready(
        cpca_channel_attention(inputs2, w1b, b1b, w2b, b2b,
                               block_budget_bytes=32 * 1024))
    ref2 = _reference(inputs2, w1b, b1b, w2b, b2b)
    assert jnp.allclose(out2, ref2, atol=1e-5, rtol=1e-5), "tiled mismatch vs reference"

    print("KERNEL_OK")
</pallas_src>

<mosaic_0001>
module attributes {stable_mosaic.version = 11 : i64} {
  func.func @_cpca_fused_kernel(%arg0: i32, %arg1: memref<2x4x256xf32, #tpu.memory_space<vmem>>, %arg2: memref<4x2xf32, #tpu.memory_space<vmem>>, %arg3: memref<1x2xf32, #tpu.memory_space<vmem>>, %arg4: memref<2x4xf32, #tpu.memory_space<vmem>>, %arg5: memref<1x4xf32, #tpu.memory_space<vmem>>, %arg6: memref<2x4x256xf32, #tpu.memory_space<vmem>>) attributes {dimension_semantics = [#tpu.dimension_semantics<parallel>], iteration_bounds = array<i64: 1>, scalar_prefetch = 0 : i64, scratch_operands = 0 : i64, tpu.core_type = #tpu.core_type<tc>, window_params = [{transform_indices = @transform_0, window_bounds = array<i64: 2, 4, 256>}, {pipeline_mode = #tpu.pipeline_mode<synchronous>, transform_indices = @transform_1, window_bounds = array<i64: 4, 2>}, {pipeline_mode = #tpu.pipeline_mode<synchronous>, transform_indices = @transform_2, window_bounds = array<i64: 1, 2>}, {pipeline_mode = #tpu.pipeline_mode<synchronous>, transform_indices = @transform_3, window_bounds = array<i64: 2, 4>}, {pipeline_mode = #tpu.pipeline_mode<synchronous>, transform_indices = @transform_4, window_bounds = array<i64: 1, 4>}, {transform_indices = @transform_5, window_bounds = array<i64: 2, 4, 256>}]} {
    %c0 = arith.constant 0 : index
    %c0_0 = arith.constant 0 : index
    %c0_1 = arith.constant 0 : index
    %0 = vector.load %arg1[%c0, %c0_0, %c0_1] : memref<2x4x256xf32, #tpu.memory_space<vmem>>, vector<2x4x256xf32>
    %cst = arith.constant dense<0.000000e+00> : vector<2x4xf32>
    %1 = vector.multi_reduction <add>, %0, %cst [2] : vector<2x4x256xf32> to vector<2x4xf32>
    %cst_2 = arith.constant dense<0xFF800000> : vector<2x4xf32>
    %2 = vector.multi_reduction <maximumf>, %0, %cst_2 [2] : vector<2x4x256xf32> to vector<2x4xf32>
    %cst_3 = arith.constant 3.906250e-03 : f32
    %3 = vector.broadcast %cst_3 : f32 to vector<2x4xf32>
    %4 = arith.mulf %1, %3 : vector<2x4xf32>
    %5 = tpu.concatenate %4, %2 in 0 : vector<2x4xf32>, vector<2x4xf32> -> vector<4x4xf32>
    %c0_4 = arith.constant 0 : index
    %c0_5 = arith.constant 0 : index
    %6 = vector.load %arg2[%c0_4, %c0_5] : memref<4x2xf32, #tpu.memory_space<vmem>>, vector<4x2xf32>
    %cst_6 = arith.constant dense<0.000000e+00> : vector<4x2xf32>
    %7 = tpu.matmul %5, %6, %cst_6 {dimension_numbers = #tpu.dot_dimension_numbers<[1], [0], [0], [1], [0, 0, 1, 1], [], []>} : vector<4x4xf32>, vector<4x2xf32>, vector<4x2xf32> -> vector<4x2xf32>
    %c0_7 = arith.constant 0 : index
    %c0_8 = arith.constant 0 : index
    %8 = vector.load %arg3[%c0_7, %c0_8] : memref<1x2xf32, #tpu.memory_space<vmem>>, vector<1x2xf32>
    %9 = vector.broadcast %8 : vector<1x2xf32> to vector<4x2xf32>
    %10 = arith.addf %7, %9 : vector<4x2xf32>
    %cst_9 = arith.constant 0.000000e+00 : f32
    %11 = vector.broadcast %cst_9 : f32 to vector<4x2xf32>
    %12 = arith.maximumf %10, %11 : vector<4x2xf32>
    %c0_10 = arith.constant 0 : index
    %c0_11 = arith.constant 0 : index
    %13 = vector.load %arg4[%c0_10, %c0_11] : memref<2x4xf32, #tpu.memory_space<vmem>>, vector<2x4xf32>
    %cst_12 = arith.constant dense<0.000000e+00> : vector<4x4xf32>
    %14 = tpu.matmul %12, %13, %cst_12 {dimension_numbers = #tpu.dot_dimension_numbers<[1], [0], [0], [1], [0, 0, 1, 1], [], []>} : vector<4x2xf32>, vector<2x4xf32>, vector<4x4xf32> -> vector<4x4xf32>
    %c0_13 = arith.constant 0 : index
    %c0_14 = arith.constant 0 : index
    %15 = vector.load %arg5[%c0_13, %c0_14] : memref<1x4xf32, #tpu.memory_space<vmem>>, vector<1x4xf32>
    %16 = vector.broadcast %15 : vector<1x4xf32> to vector<4x4xf32>
    %17 = arith.addf %14, %16 : vector<4x4xf32>
    %18 = arith.negf %17 : vector<4x4xf32>
    %19 = math.exp %18 : vector<4x4xf32>
    %cst_15 = arith.constant 1.000000e+00 : f32
    %20 = vector.broadcast %cst_15 : f32 to vector<4x4xf32>
    %21 = arith.addf %20, %19 : vector<4x4xf32>
    %22 = arith.divf %20, %21 : vector<4x4xf32>
    %23 = vector.extract_strided_slice %22 {offsets = [0, 0], sizes = [2, 4], strides = [1, 1]} : vector<4x4xf32> to vector<2x4xf32>
    %24 = vector.extract_strided_slice %22 {offsets = [2, 0], sizes = [2, 4], strides = [1, 1]} : vector<4x4xf32> to vector<2x4xf32>
    %25 = arith.addf %23, %24 : vector<2x4xf32>
    %26 = vector.shape_cast %25 : vector<2x4xf32> to vector<2x4x1xf32>
    %27 = vector.broadcast %26 : vector<2x4x1xf32> to vector<2x4x256xf32>
    %28 = arith.mulf %0, %27 : vector<2x4x256xf32>
    %c0_16 = arith.constant 0 : index
    %c0_17 = arith.constant 0 : index
    %c0_18 = arith.constant 0 : index
    %29 = vector.load %arg6[%c0_16, %c0_17, %c0_18] : memref<2x4x256xf32, #tpu.memory_space<vmem>>, vector<2x4x256xf32>
    tpu.vector_store %arg6[%c0_16, %c0_17, %c0_18], %28 {strides = array<i32>} : memref<2x4x256xf32, #tpu.memory_space<vmem>>, vector<2x4x256xf32>,
    return
  }
  func.func @transform_0(%arg0: i32) -> (i32, i32, i32) {
    %c0_i32 = arith.constant 0 : i32
    %c0_i32_0 = arith.constant 0 : i32
    %c0_i32_1 = arith.constant 0 : i32
    return %arg0, %c0_i32, %c0_i32_0 : i32, i32, i32
  }
  func.func @transform_1(%arg0: i32) -> (i32, i32) {
    %c0_i32 = arith.constant 0 : i32
    %c0_i32_0 = arith.constant 0 : i32
    %c0_i32_1 = arith.constant 0 : i32
    return %c0_i32, %c0_i32_0 : i32, i32
  }
  func.func @transform_2(%arg0: i32) -> (i32, i32) {
    %c0_i32 = arith.constant 0 : i32
    %c0_i32_0 = arith.constant 0 : i32
    %c0_i32_1 = arith.constant 0 : i32
    return %c0_i32, %c0_i32_0 : i32, i32
  }
  func.func @transform_3(%arg0: i32) -> (i32, i32) {
    %c0_i32 = arith.constant 0 : i32
    %c0_i32_0 = arith.constant 0 : i32
    %c0_i32_1 = arith.constant 0 : i32
    return %c0_i32, %c0_i32_0 : i32, i32
  }
  func.func @transform_4(%arg0: i32) -> (i32, i32) {
    %c0_i32 = arith.constant 0 : i32
    %c0_i32_0 = arith.constant 0 : i32
    %c0_i32_1 = arith.constant 0 : i32
    return %c0_i32, %c0_i32_0 : i32, i32
  }
  func.func @transform_5(%arg0: i32) -> (i32, i32, i32) {
    %c0_i32 = arith.constant 0 : i32
    %c0_i32_0 = arith.constant 0 : i32
    %c0_i32_1 = arith.constant 0 : i32
    return %arg0, %c0_i32, %c0_i32_0 : i32, i32, i32
  }
}

</mosaic_0001>

<llo_original>
// kernel: tpu_custom_call.1
$region0: #{tpu_custom_call.1}
  #allocation0 [shape = 'u32[]', space=smem, size = 0x4, offset = 0x4, fixed_abs, tag = 'smem constant byte address 0x4 - core index']
  #allocation1 [shape = 'u32[144,128]{1,0:T(1,128)}', space=vmem, size = 0x12000, scoped, tag = 'internal scratch']
  %s0 = inlined_call_operand.hbm [shape: f32[2,4,256], index: 0, kind: input, shape index: {}]
  %s1 = inlined_call_operand.vmem [shape: f32[4,2], index: 1, kind: input, shape index: {}]
  %s2 = inlined_call_operand.vmem [shape: f32[1,2], index: 2, kind: input, shape index: {}]
  %s3 = inlined_call_operand.vmem [shape: f32[2,4], index: 3, kind: input, shape index: {}]
  %s4 = inlined_call_operand.vmem [shape: f32[1,4], index: 4, kind: input, shape index: {}]
  %s5 = inlined_call_operand.hbm [shape: f32[2,4,256], index: 5, kind: output, shape index: {}]
  %s6 = sld [smem:[#allocation0]]
  $region34: #{tpu_custom_call.1} parent=0
    _
  %s8 = ssub.s32 1, %s6
  %s9 = scalar_select 0, %s8, %s6
  $region1: #{tpu_custom_call.1} parent=0
    #allocation2 [shape = 'u8[8192]{0}', space=vmem, size = 0x2000, scoped, tag = 'input window, operand 0, single buffered']
    #allocation3 [shape = 's32[1]{0}', space=sflag, size = 0x4, scoped, tag = 'scoped memory for tpu_custom_call.1']
    #allocation4 [shape = 's32[1]{0}', space=sflag, size = 0x4, scoped, tag = 'scoped memory for tpu_custom_call.1']
    #allocation5 [shape = 'u8[8192]{0}', space=vmem, size = 0x2000, scoped, tag = 'output window, operand 0, single buffered']
    %10 = vsyncpa [#allocation3], 0
    %11 = vsyncpa [#allocation4], 0
    // Predicated region
    $region2: #{tpu_custom_call.1} parent=1 // pred_check
      _
    $region3: #{tpu_custom_call.1} parent=1 // pred_check_branch
      %13 = sbr.rel (0) target = $region5
    $region4: #{tpu_custom_call.1} parent=1 // pred_region
      %s15 = ssub.s32 256, 256
      %16 = vsyncadd [#allocation3], %s15
      %s17 = sshll.u32 [#allocation2], 4
      %s18 = int_to_ptr.vmem [resolvable:$true] %s17
      %23 = dma.hbm_to_vmem [thread:$0]  %s0, 256, %s18, [#allocation3], 128, 128, 8
    $region5: #{tpu_custom_call.1} parent=1 // pred_fallthru
      _
    // Predicated region
    $region6: #{tpu_custom_call.1} parent=1 // pred_check
      _
    $region7: #{tpu_custom_call.1} parent=1 // pred_check_branch
      %25 = sbr.rel (0) target = $region9
    $region8: #{tpu_custom_call.1} parent=1 // pred_region
      _
    $region9: #{tpu_custom_call.1} parent=1 // pred_fallthru
      _
    // Predicated region
    $region10: #{tpu_custom_call.1} parent=1 // pred_check
      _
    $region11: #{tpu_custom_call.1} parent=1 // pred_check_branch
      %27 = sbr.rel (0) target = $region13
    $region12: #{tpu_custom_call.1} parent=1 // pred_region
      _
    $region13: #{tpu_custom_call.1} parent=1 // pred_fallthru
      _
    // Predicated region
    $region14: #{tpu_custom_call.1} parent=1 // pred_check
      _
    $region15: #{tpu_custom_call.1} parent=1 // pred_check_branch
      %29 = sbr.rel (0) target = $region17
    $region16: #{tpu_custom_call.1} parent=1 // pred_region
      _
    $region17: #{tpu_custom_call.1} parent=1 // pred_fallthru
      _
    // Predicated region
    $region18: #{tpu_custom_call.1} parent=1 // pred_check
      _
    $region19: #{tpu_custom_call.1} parent=1 // pred_check_branch
      %31 = sbr.rel (0) target = $region21
    $region20: #{tpu_custom_call.1} parent=1 // pred_region
      _
    $region21: #{tpu_custom_call.1} parent=1 // pred_fallthru
      _
    // Predicated region
    $region22: #{tpu_custom_call.1} parent=1 // pred_check
      _
    $region23: #{tpu_custom_call.1} parent=1 // pred_check_branch
      %33 = sbr.rel (0) target = $region25
    $region24: #{tpu_custom_call.1} parent=1 // pred_region
      %34 = dma.done [#allocation3], 256
    $region25: #{tpu_custom_call.1} parent=1 // pred_fallthru
      _
    %v35 = vld [vmem:[#allocation2] sm:$0xff]
    %v36 = vld [vmem:[#allocation2 + $0x8] sm:$0xff]
    %v39 = vcombine.high %v35, %v35
    %v40 = vcombine.high %v36, %v36
    %vm43 = vcmask 1043456
    %v44 = vsel %vm43, %v35, 0.0
    %v45 = vsel %vm43, %v39, 0.0
    %v46 = vadd.f32 %v44, %v45
    %47 = vadd.xlane.f32.xlu0 %v46
    %v48 = vpop.xlane.xlu0 %47
    %v49 = vsel %vm43, %v36, 0.0
    %v50 = vsel %vm43, %v40, 0.0
    %v51 = vadd.f32 %v49, %v50
    %52 = vadd.xlane.f32.xlu0 %v51
    %v53 = vpop.xlane.xlu0 %52
    %v54 = vsel %vm43, %v35, -inf
    %v55 = vsel %vm43, %v39, -inf
    %v56 = vmax.f32 %v54, %v55
    %57 = vmax.xlane.f32.xlu0 %v56
    %v58 = vpop.xlane.xlu0 %57
    %v59 = vsel %vm43, %v36, -inf
    %v60 = vsel %vm43, %v40, -inf
    %v61 = vmax.f32 %v59, %v60
    %62 = vmax.xlane.f32.xlu0 %v61
    %v63 = vpop.xlane.xlu0 %62
    %v64 = vmul.f32 %v48, 0.00390625
    %v65 = vmul.f32 %v53, 0.00390625
    %v68 = vlaneseq
    %v69 = vand.u32 %v68, 127
    %v70 = vlaneseq
    %v71 = vshrl.u32 %v70, 7
    %v72 = vsub.s32 %v69, %v71
    %v73 = vrot.slane %v64, %v72
    %v74 = vlaneseq
    %v75 = vshrl.u32 %v74, 7
    %v76 = vsub.s32 %v69, %v75
    %v77 = vrot.slane %v65, %v76
    %vm78 = vcmask 1041409
    %v79 = vsel %vm78, %v77, %v73
    %v83 = vlaneseq
    %v84 = vshrl.u32 %v83, 7
    %v85 = vsub.s32 %v69, %v84
    %v86 = vrot.slane %v58, %v85
    %v87 = vlaneseq
    %v88 = vshrl.u32 %v87, 7
    %v89 = vsub.s32 %v69, %v88
    %v90 = vrot.slane %v63, %v89
    %vm91 = vcmask 1043459
    %v92 = vsel %vm91, %v90, %v86
    %vm94 = vcmask 1041408
    %v95 = vsel %vm94, %v79, %v92
    %v96 = vld [vmem:[%s1] sm:$0xf]
    %v97 = vld [vmem:[%s2] sm:$0x1]
    %v99 = vlaneseq
    %v100 = vshrl.u32 %v99, 7
    %v101 = vsub.s32 0, %v100
    %v102 = vrot.slane %v97, %v101
    %vm104 = vcmask 31744
    %v106 = vsel %vm104, %v95, 0
    %v109 = vsel %vm43, %v96, 0
    %111 = vmatprep.subr.mxu0 0.0
    %112 = vmatpush1.msra.mxu0 %v109
    %113 = vmatprep.subr.mxu0 0.0
    %114 = vmatpush1.msra.mxu0 0.0
    %115 = vmatprep.subr.mxu0 0.0
    %116 = vmatpush1.msra.mxu0 0.0
    %117 = vmatprep.subr.mxu0 0.0
    %118 = vmatpush1.msra.mxu0 0.0
    %119 = vmatprep.subr.mxu0 0.0
    %120 = vmatpush1.msra.mxu0 0.0
    %121 = vmatprep.subr.mxu0 0.0
    %122 = vmatpush1.msra.mxu0 0.0
    %123 = vmatprep.subr.mxu0 0.0
    %124 = vmatpush1.msra.mxu0 0.0
    %125 = vmatprep.subr.mxu0 0.0
    %126 = vmatpush1.msra.mxu0 0.0
    %127 = vmatprep.subr.mxu0 0.0
    %128 = vmatpush1.msra.mxu0 0.0
    %129 = vmatprep.subr.mxu0 0.0
    %130 = vmatpush1.msra.mxu0 0.0
    %131 = vmatprep.subr.mxu0 0.0
    %132 = vmatpush1.msra.mxu0 0.0
    %133 = vmatprep.subr.mxu0 0.0
    %134 = vmatpush1.msra.mxu0 0.0
    %135 = vmatprep.subr.mxu0 0.0
    %136 = vmatpush1.msra.mxu0 0.0
    %137 = vmatprep.subr.mxu0 0.0
    %138 = vmatpush1.msra.mxu0 0.0
    %139 = vmatprep.subr.mxu0 0.0
    %140 = vmatpush1.msra.mxu0 0.0
    %141 = vmatprep.subr.mxu0 0.0
    %142 = vmatpush1.msra.mxu0 0.0
    %143 = vmatprep.subr.mxu0 0.0
    %144 = vmatpush1.msra.mxu0 0.0
    %145 = vmatprep.subr.mxu0 0.0
    %146 = vmatpush1.msra.mxu0 0.0
    %147 = vmatprep.subr.mxu0 0.0
    %148 = vmatpush1.msra.mxu0 0.0
    %149 = vmatprep.subr.mxu0 0.0
    %150 = vmatpush1.msra.mxu0 0.0
    %151 = vmatprep.subr.mxu0 0.0
    %152 = vmatpush1.msra.mxu0 0.0
    %153 = vmatprep.subr.mxu0 0.0
    %154 = vmatpush1.msra.mxu0 0.0
    %155 = vmatprep.subr.mxu0 0.0
    %156 = vmatpush1.msra.mxu0 0.0
    %157 = vmatprep.subr.mxu0 0.0
    %158 = vmatpush1.msra.mxu0 0.0
    %159 = vmatprep.subr.mxu0 0.0
    %160 = vmatpush1.msra.mxu0 0.0
    %161 = vmatprep.subr.mxu0 0.0
    %162 = vmatpush1.msra.mxu0 0.0
    %163 = vmatprep.subr.mxu0 0.0
    %164 = vmatpush1.msra.mxu0 0.0
    %165 = vmatprep.subr.mxu0 0.0
    %166 = vmatpush1.msra.mxu0 0.0
    %167 = vmatprep.subr.mxu0 0.0
    %168 = vmatpush1.msra.mxu0 0.0
    %169 = vmatprep.subr.mxu0 0.0
    %170 = vmatpush1.msra.mxu0 0.0
    %171 = vmatprep.subr.mxu0 0.0
    %172 = vmatpush1.msra.mxu0 0.0
    %173 = vmatprep.subr.mxu0 0.0
    %174 = vmatpush1.msra.mxu0 0.0
    %175 = vmatprep.mubr.f32.mxu0 0.0
    %176 = vmatmul.mubr.f32.gmra.mrb[0].mxu0 %v106
    %v177 = vpop.f32.mrb[0].mxu0
    %v178 = vadd.f32 %v102, %v177
    %v179 = vpop.f32.mrb[0].mxu0
    %180 = vdwg.mxu0
    %v181 = vmax.f32 %v178, 0.0
    %v182 = vld [vmem:[%s3] sm:$0x3]
    %v183 = vld [vmem:[%s4] sm:$0x1]
    %v185 = vlaneseq
    %v186 = vshrl.u32 %v185, 7
    %v187 = vsub.s32 0, %v186
    %v188 = vrot.slane %v183, %v187
    %vm190 = vcmask 15360
    %v192 = vsel %vm190, %v181, 0
    %v195 = vsel %vm94, %v182, 0
    %197 = vmatprep.subr.mxu0 0.0
    %198 = vmatpush1.msra.mxu0 %v195
    %199 = vmatprep.subr.mxu0 0.0
    %200 = vmatpush1.msra.mxu0 0.0
    %201 = vmatprep.subr.mxu0 0.0
    %202 = vmatpush1.msra.mxu0 0.0
    %203 = vmatprep.subr.mxu0 0.0
    %204 = vmatpush1.msra.mxu0 0.0
    %205 = vmatprep.subr.mxu0 0.0
    %206 = vmatpush1.msra.mxu0 0.0
    %207 = vmatprep.subr.mxu0 0.0
    %208 = vmatpush1.msra.mxu0 0.0
    %209 = vmatprep.subr.mxu0 0.0
    %210 = vmatpush1.msra.mxu0 0.0
    %211 = vmatprep.subr.mxu0 0.0
    %212 = vmatpush1.msra.mxu0 0.0
    %213 = vmatprep.subr.mxu0 0.0
    %214 = vmatpush1.msra.mxu0 0.0
    %215 = vmatprep.subr.mxu0 0.0
    %216 = vmatpush1.msra.mxu0 0.0
    %217 = vmatprep.subr.mxu0 0.0
    %218 = vmatpush1.msra.mxu0 0.0
    %219 = vmatprep.subr.mxu0 0.0
    %220 = vmatpush1.msra.mxu0 0.0
    %221 = vmatprep.subr.mxu0 0.0
    %222 = vmatpush1.msra.mxu0 0.0
    %223 = vmatprep.subr.mxu0 0.0
    %224 = vmatpush1.msra.mxu0 0.0
    %225 = vmatprep.subr.mxu0 0.0
    %226 = vmatpush1.msra.mxu0 0.0
    %227 = vmatprep.subr.mxu0 0.0
    %228 = vmatpush1.msra.mxu0 0.0
    %229 = vmatprep.subr.mxu0 0.0
    %230 = vmatpush1.msra.mxu0 0.0
    %231 = vmatprep.subr.mxu0 0.0
    %232 = vmatpush1.msra.mxu0 0.0
    %233 = vmatprep.subr.mxu0 0.0
    %234 = vmatpush1.msra.mxu0 0.0
    %235 = vmatprep.subr.mxu0 0.0
    %236 = vmatpush1.msra.mxu0 0.0
    %237 = vmatprep.subr.mxu0 0.0
    %238 = vmatpush1.msra.mxu0 0.0
    %239 = vmatprep.subr.mxu0 0.0
    %240 = vmatpush1.msra.mxu0 0.0
    %241 = vmatprep.subr.mxu0 0.0
    %242 = vmatpush1.msra.mxu0 0.0
    %243 = vmatprep.subr.mxu0 0.0
    %244 = vmatpush1.msra.mxu0 0.0
    %245 = vmatprep.subr.mxu0 0.0
    %246 = vmatpush1.msra.mxu0 0.0
    %247 = vmatprep.subr.mxu0 0.0
    %248 = vmatpush1.msra.mxu0 0.0
    %249 = vmatprep.subr.mxu0 0.0
    %250 = vmatpush1.msra.mxu0 0.0
    %251 = vmatprep.subr.mxu0 0.0
    %252 = vmatpush1.msra.mxu0 0.0
    %253 = vmatprep.subr.mxu0 0.0
    %254 = vmatpush1.msra.mxu0 0.0
    %255 = vmatprep.subr.mxu0 0.0
    %256 = vmatpush1.msra.mxu0 0.0
    %257 = vmatprep.subr.mxu0 0.0
    %258 = vmatpush1.msra.mxu0 0.0
    %259 = vmatprep.subr.mxu0 0.0
    %260 = vmatpush1.msra.mxu0 0.0
    %261 = vmatprep.mubr.f32.mxu0 0.0
    %262 = vmatmul.mubr.f32.gmra.mrb[0].mxu0 %v192
    %v263 = vpop.f32.mrb[0].mxu0
    %v264 = vadd.f32 %v188, %v263
    %v265 = vpop.f32.mrb[0].mxu0
    %266 = vdwg.mxu0
    %v267 = vxor.u32 %v264, 2147483648
    %v268 = vmul.f32 %v267, 1.442695
    %v269 = vpow.pop %v268
    %v270 = vadd.f32 %v269, 1.0
    %v271 = vrcp.pop %v270
    %v272 = vmul.f32 1.0, %v271
    %v274 = vrot.slane %v272, 2
    %v276 = vadd.f32 %v272, %v274
    %v277 = vlaneseq
    %v278 = vshrl.u32 %v277, 7
    %v279 = vsub.s32 0, %v278
    %v280 = vrot.slane %v276, %v279
    %282 = vbcast.lane.b32.xlu0 %v280, 256
    %v283 = vpop.permute.xlu0 %282
    %v284 = vlaneseq
    %v285 = vshrl.u32 %v284, 7
    %v286 = vsub.s32 1, %v285
    %v287 = vrot.slane %v276, %v286
    %289 = vbcast.lane.b32.xlu0 %v287, 256
    %v290 = vpop.permute.xlu0 %289
    %v294 = vunpack.c.l.s4 839922192
    %v295 = vunpack.c.0.s8 %v294
    %v296 = vlaneseq
    %v297 = vshrl.u32 %v296, 7
    %v298 = vsub.s32 %v295, %v297
    %v299 = vrot.slane %v283, %v298
    %v301 = vunpack.c.l.s4 839922192
    %v302 = vunpack.c.0.s8 %v301
    %v303 = vlaneseq
    %v304 = vshrl.u32 %v303, 7
    %v305 = vsub.s32 %v302, %v304
    %v306 = vrot.slane %v290, %v305
    %v309 = vmul.f32 %v35, %v299
    %v310 = vmul.f32 %v36, %v306
    %311 = vst [vmem:[#allocation5] sm:$0xff] %v309
    %312 = vst [vmem:[#allocation5 + $0x8] sm:$0xff] %v310
    // Predicated region
    $region26: #{tpu_custom_call.1} parent=1 // pred_check
      _
    $region27: #{tpu_custom_call.1} parent=1 // pred_check_branch
      %314 = sbr.rel (0) target = $region29
    $region28: #{tpu_custom_call.1} parent=1 // pred_region
      %s316 = ssub.s32 256, 256
      %317 = vsyncadd [#allocation4], %s316
      %s318 = sshll.u32 [#allocation5], 4
      %s319 = int_to_ptr.vmem [resolvable:$true] %s318
      %324 = dma.vmem_to_hbm [thread:$0]  %s319, 256, %s5, [#allocation4], 128, 128, 8
    $region29: #{tpu_custom_call.1} parent=1 // pred_fallthru
      _
    // Predicated region
    $region30: #{tpu_custom_call.1} parent=1 // pred_check
      _
    $region31: #{tpu_custom_call.1} parent=1 // pred_check_branch
      %326 = sbr.rel (0) target = $region33
    $region32: #{tpu_custom_call.1} parent=1 // pred_region
      %327 = dma.done [#allocation4], 256
    $region33: #{tpu_custom_call.1} parent=1 // pred_fallthru
      _
    %328 = vsyncpa [#allocation3], 1
    %329 = vsyncpa [#allocation4], 1

</llo_original>
